<compile_context>
chip_gen: v7x
topology: tpu7x:2x2x1
jax: 0.10.0
libtpu: 0.0.40
codegen_flags: <defaults>
</compile_context>

<pallas_src>
import math

import jax
import jax.numpy as jnp
from jax import lax
from jax.experimental import pallas as pl
from jax.experimental.pallas import tpu as pltpu


_TARGET_BLOCK_BYTES = 2 << 20   # ~2 MB input block: DMA dominates step overhead
_STEPS_TARGET = 8               # enough grid steps for pipelining + 2 TCs (v7x)


def _round_up(x, m):
    return ((x + m - 1) // m) * m


def _round_down(x, m):
    return (x // m) * m


def _reduce_identity(dtype):
    dtype = jnp.dtype(dtype)
    if jnp.issubdtype(dtype, jnp.floating):
        return -jnp.inf
    return int(jnp.iinfo(dtype).min)


def _vmem_limit_bytes():
    """Generation-aware VMEM limit with headroom below physical capacity."""
    try:
        phys = int(pltpu.get_tpu_info().vmem_capacity_bytes)
    except Exception:
        phys = 64 << 20  # conservative (v7x-sized) fallback
    # v7x (64 MiB/TC) -> ~52 MB; v5e/v6e (128 MiB) -> capped at 56 MB.
    return int(max(32 << 20, min(phys - (12 << 20), 56 << 20)))


def _make_kernel(C, C_T, ident):
    """Max over the channel axis (axis=1 of the block), accumulated across the
    innermost (arbitrary) C-chunk grid axis into the resident output block."""
    ragged_c = (C % C_T) != 0

    def kernel(x_ref, o_ref):
        c = pl.program_id(2)
        x = x_ref[...]
        if ragged_c:
            # Mask channels past C in the last (ragged) channel chunk.
            ch = c * C_T + lax.broadcasted_iota(jnp.int32, x.shape, 1)
            x = jnp.where(ch < C, x, jnp.asarray(ident, x.dtype))
        keepdims = len(x_ref.shape) == len(o_ref.shape)
        part = jnp.max(x, axis=1, keepdims=keepdims)

        @pl.when(c == 0)
        def _():
            o_ref[...] = part

        @pl.when(c > 0)
        def _():
            o_ref[...] = jnp.maximum(o_ref[...], part)

    return kernel


def max_map(x):
    """Compute max over dim=1 of a [B, C, *spatial] tensor -> [B, *spatial]."""
    assert x.ndim > 2, "MaxMap expects a tensor with more than 2 dims"
    B, C = x.shape[0], x.shape[1]
    spatial = x.shape[2:]
    HW = math.prod(spatial)
    dtype = x.dtype
    itemsize = jnp.dtype(dtype).itemsize
    ident = _reduce_identity(dtype)

    vmem_limit = _vmem_limit_bytes()
    # Input blocks are double-buffered; keep them well under the limit.
    max_block = min(vmem_limit // 4, 12 << 20)

    cost = pl.CostEstimate(
        flops=B * C * HW,
        transcendentals=0,
        bytes_accessed=(B * C * HW + B * HW) * itemsize,
    )
    cparams = pltpu.CompilerParams(
        dimension_semantics=("parallel", "parallel", "arbitrary"),
        vmem_limit_bytes=vmem_limit,
    )

    if HW % 128 == 0:
        # --- 2-D spatial tiles: (B, C, S_total, 128), block (1, C_T, S_T, 128) ---
        S_total = HW // 128
        row_bytes = 128 * itemsize

        if C * 8 * row_bytes <= max_block:
            C_T = C
        else:
            C_T = max(1, max_block // (8 * row_bytes))
        n_c = pl.cdiv(C, C_T)

        S_T = max(8, _round_down(_TARGET_BLOCK_BYTES // (C_T * row_bytes), 8))
        S_T = min(S_T, max(8, _round_down(max_block // (C_T * row_bytes), 8)))
        if B * n_c < _STEPS_TARGET:
            want_blocks = pl.cdiv(_STEPS_TARGET, B * n_c)
            S_T = min(S_T, max(8, _round_up(pl.cdiv(S_total, want_blocks), 8)))
        if S_T >= S_total:
            S_T = S_total  # full extent is always a legal block size

        grid = (B, pl.cdiv(S_total, S_T), n_c)
        x_r = x.reshape(B, C, S_total, 128)

        out = pl.pallas_call(
            _make_kernel(C, C_T, ident),
            out_shape=jax.ShapeDtypeStruct((B, S_total, 128), dtype),
            grid_spec=pltpu.PrefetchScalarGridSpec(
                num_scalar_prefetch=0,
                grid=grid,
                in_specs=[
                    pl.BlockSpec((1, C_T, S_T, 128), lambda b, s, c: (b, c, s, 0))
                ],
                out_specs=pl.BlockSpec((1, S_T, 128), lambda b, s, c: (b, s, 0)),
            ),
            compiler_params=cparams,
            cost_estimate=cost,
        )(x_r)
        return out.reshape((B,) + spatial)

    else:
        # --- Flat lane-dense layout: (B, C, HW), block (1, C_T, TILE) ---
        pack = max(1, 32 // itemsize)  # sublane packing (f32:8, bf16:16, int8:32)
        per_lane = _round_up(C, pack) * itemsize
        if per_lane * 128 <= max_block:
            C_T = C
        else:
            # Chunked channel axis must be a multiple of 8 (block-shape rule).
            C_T = max(8, _round_down(max_block // (128 * itemsize), 8))
            per_lane = _round_up(C_T, pack) * itemsize
        n_c = pl.cdiv(C, C_T)

        TILE = max(128, _round_down(_TARGET_BLOCK_BYTES // per_lane, 128))
        TILE = min(TILE, max(128, _round_down(max_block // per_lane, 128)))
        if B * n_c < _STEPS_TARGET:
            want_blocks = pl.cdiv(_STEPS_TARGET, B * n_c)
            TILE = min(TILE, max(128, _round_up(pl.cdiv(HW, want_blocks), 128)))
        if TILE >= HW:
            TILE = HW  # full extent

        grid = (B, pl.cdiv(HW, TILE), n_c)
        x_r = x.reshape(B, C, HW)

        out = pl.pallas_call(
            _make_kernel(C, C_T, ident),
            out_shape=jax.ShapeDtypeStruct((B, 1, HW), dtype),
            grid_spec=pltpu.PrefetchScalarGridSpec(
                num_scalar_prefetch=0,
                grid=grid,
                in_specs=[pl.BlockSpec((1, C_T, TILE), lambda b, t, c: (b, c, t))],
                out_specs=pl.BlockSpec((1, 1, TILE), lambda b, t, c: (b, 0, t)),
            ),
            compiler_params=cparams,
            cost_estimate=cost,
        )(x_r)
        return out.reshape((B,) + spatial)


if __name__ == "__main__":
    key = jax.random.PRNGKey(0)

    cases = [
        (2, 4, (16, 16)),   # lane-aligned spatial (2-D tile path)
        (2, 3, (24, 24)),   # HW not a multiple of 128 (flat, ragged lane blocks)
        (2, 4, (48, 48)),   # lane-aligned with ragged spatial (sublane) blocks
    ]
    for i, (B, C, spatial) in enumerate(cases):
        key, sub = jax.random.split(key)
        # Recommend positive values (post-ReLU), so use ReLU of normals.
        x = jax.nn.relu(jax.random.normal(sub, (B, C) + spatial, dtype=jnp.float32))
        out = jax.block_until_ready(max_map(x))
        ref = jnp.max(x, axis=1)
        assert out.shape == (B,) + spatial, (out.shape, (B,) + spatial)
        assert jnp.allclose(out, ref), f"mismatch vs reference in case {i}"

    print("KERNEL_OK")
</pallas_src>

<mosaic_0001>
module attributes {stable_mosaic.version = 11 : i64} {
  func.func @kernel(%arg0: i32, %arg1: i32, %arg2: i32, %arg3: memref<1x4x2x128xf32, #tpu.memory_space<vmem>>, %arg4: memref<1x2x128xf32, #tpu.memory_space<vmem>>) attributes {dimension_semantics = [#tpu.dimension_semantics<parallel>, #tpu.dimension_semantics<parallel>, #tpu.dimension_semantics<arbitrary>], iteration_bounds = array<i64: 2, 1, 1>, scalar_prefetch = 0 : i64, scratch_operands = 0 : i64, tpu.core_type = #tpu.core_type<tc>, window_params = [{transform_indices = @transform_0, window_bounds = array<i64: 1, 4, 2, 128>}, {transform_indices = @transform_1, window_bounds = array<i64: 1, 2, 128>}]} {
    %c0 = arith.constant 0 : index
    %c0_0 = arith.constant 0 : index
    %c0_1 = arith.constant 0 : index
    %c0_2 = arith.constant 0 : index
    %0 = vector.load %arg3[%c0, %c0_0, %c0_1, %c0_2] : memref<1x4x2x128xf32, #tpu.memory_space<vmem>>, vector<1x4x2x128xf32>
    %cst = arith.constant dense<0xFF800000> : vector<1x2x128xf32>
    %1 = vector.multi_reduction <maximumf>, %0, %cst [1] : vector<1x4x2x128xf32> to vector<1x2x128xf32>
    %c0_i32 = arith.constant 0 : i32
    %2 = arith.cmpi eq, %arg2, %c0_i32 : i32
    %3 = arith.extui %2 : i1 to i32
    %c0_i32_3 = arith.constant 0 : i32
    %4 = arith.cmpi ne, %3, %c0_i32_3 : i32
    scf.if %4 {
      %c0_6 = arith.constant 0 : index
      %c0_7 = arith.constant 0 : index
      %c0_8 = arith.constant 0 : index
      %8 = vector.load %arg4[%c0_6, %c0_7, %c0_8] : memref<1x2x128xf32, #tpu.memory_space<vmem>>, vector<1x2x128xf32>
      tpu.vector_store %arg4[%c0_6, %c0_7, %c0_8], %1 {strides = array<i32>} : memref<1x2x128xf32, #tpu.memory_space<vmem>>, vector<1x2x128xf32>,
    } else {
    }
    %c0_i32_4 = arith.constant 0 : i32
    %5 = arith.cmpi sgt, %arg2, %c0_i32_4 : i32
    %6 = arith.extui %5 : i1 to i32
    %c0_i32_5 = arith.constant 0 : i32
    %7 = arith.cmpi ne, %6, %c0_i32_5 : i32
    scf.if %7 {
      %c0_6 = arith.constant 0 : index
      %c0_7 = arith.constant 0 : index
      %c0_8 = arith.constant 0 : index
      %8 = vector.load %arg4[%c0_6, %c0_7, %c0_8] : memref<1x2x128xf32, #tpu.memory_space<vmem>>, vector<1x2x128xf32>
      %9 = arith.maximumf %8, %1 : vector<1x2x128xf32>
      %c0_9 = arith.constant 0 : index
      %c0_10 = arith.constant 0 : index
      %c0_11 = arith.constant 0 : index
      %10 = vector.load %arg4[%c0_9, %c0_10, %c0_11] : memref<1x2x128xf32, #tpu.memory_space<vmem>>, vector<1x2x128xf32>
      tpu.vector_store %arg4[%c0_9, %c0_10, %c0_11], %9 {strides = array<i32>} : memref<1x2x128xf32, #tpu.memory_space<vmem>>, vector<1x2x128xf32>,
    } else {
    }
    return
  }
  func.func @transform_0(%arg0: i32, %arg1: i32, %arg2: i32) -> (i32, i32, i32, i32) {
    %c0_i32 = arith.constant 0 : i32
    %c0_i32_0 = arith.constant 0 : i32
    return %arg0, %arg2, %arg1, %c0_i32 : i32, i32, i32, i32
  }
  func.func @transform_1(%arg0: i32, %arg1: i32, %arg2: i32) -> (i32, i32, i32) {
    %c0_i32 = arith.constant 0 : i32
    %c0_i32_0 = arith.constant 0 : i32
    return %arg0, %arg1, %c0_i32 : i32, i32, i32
  }
}

</mosaic_0001>

<llo_original>
// kernel: tpu_custom_call.1
$region0: #{tpu_custom_call.1}
  #allocation0 [shape = 'u32[]', space=smem, size = 0x4, offset = 0x4, fixed_abs, tag = 'smem constant byte address 0x4 - core index']
  #allocation1 [shape = 'u32[144,128]{1,0:T(1,128)}', space=vmem, size = 0x12000, scoped, tag = 'internal scratch']
  %s0 = inlined_call_operand.hbm [shape: f32[2,4,2,128], index: 0, kind: input, shape index: {}]
  %s1 = inlined_call_operand.hbm [shape: f32[2,2,128], index: 1, kind: output, shape index: {}]
  %s2 = sld [smem:[#allocation0]]
  $region49: #{tpu_custom_call.1} parent=0
    _
  %s4 = ssub.s32 1, %s2
  %s5 = scalar_select 0, %s4, %s2
  $region1: #{tpu_custom_call.1} parent=0
    #allocation2 [shape = 'u8[8192]{0}', space=vmem, size = 0x2000, scoped, tag = 'input window, operand 0']
    #allocation3 [shape = 's32[2]{0}', space=sflag, size = 0x8, scoped, tag = 'scoped memory for tpu_custom_call.1']
    #allocation4 [shape = 's32[2]{0}', space=sflag, size = 0x8, scoped, tag = 'scoped memory for tpu_custom_call.1']
    #allocation5 [shape = 'u8[2048]{0}', space=vmem, size = 0x800, scoped, tag = 'output window, operand 0']
    %6 = vsyncpa [#allocation3], 0
    %s7 = scalar_lea.sflag [#allocation3], 1
    %8 = vsyncpa %s7, 0
    %9 = vsyncpa [#allocation4], 0
    %s10 = scalar_lea.sflag [#allocation4], 1
    %11 = vsyncpa %s10, 0
    loop: start=0, step=1, limit=4
    $region2: #{tpu_custom_call.1} parent=1 // loop_pre_header
      _
    $region3: #{tpu_custom_call.1} parent=1 // loop_header
      %s13 = sphi 0, %s17
      %p14 = scmp.ge.s32.totalorder %s13, 4
      %s20 = sphi 0, %s39
      %s21 = sphi 0, %s35
      %s22 = sphi 0, %s31
      %s23 = sphi 0, %s20
      %s24 = sphi 0, %s21
      %s25 = sphi 0, %s22
      %s26 = sphi 0, %s23
      %s27 = sphi 0, %s24
      %s28 = sphi 0, %s25
      %s46 = sphi 0, %s48
      %s49 = sphi 0, %s46
      %s50 = sphi 0, %s49
      %s66 = sphi 0, %s50
      %s74 = sphi 0, %s76
      %s77 = sphi 0, %s74
      %s78 = sphi 0, %s77
      %s94 = sphi 0, %s78
    $region4: #{tpu_custom_call.1} parent=1 // loop_header_branch
      %16 = sbr.rel (%p14) target = $region8
    $region5: #{tpu_custom_call.1} parent=1 // loop_body
      %s18 = ssub.s32 %s13, 1
      %s19 = ssub.s32 %s13, 2
      %s29 = sadd.s32 1, %s22
      %p30 = scmp.ge.s32.totalorder %s29, 1
      %s31 = scalar_select %p30, 0, %s29
      %s32 = sadd.s32 1, %s21
      %s33 = scalar_select %p30, %s32, %s21
      %p34 = scmp.ge.s32.totalorder %s33, 1
      %s35 = scalar_select %p34, 0, %s33
      %s36 = sadd.s32 1, %s20
      %s37 = scalar_select %p34, %s36, %s20
      %p38 = scmp.ge.s32.totalorder %s37, 2
      %s39 = scalar_select %p38, 0, %s37
      %s40 = ssub.s32 %s20, %s39
      %s41 = ssub.s32 %s22, %s31
      %s42 = sor.u32 %s40, %s41
      %s43 = ssub.s32 %s21, %s35
      %s44 = sor.u32 %s42, %s43
      %p45 = scmp.eq.s32.totalorder %s44, 0
      %s47 = sadd.s32 %s46, 1
      %s48 = scalar_select %p45, %s46, %s47
      %p51 = pneg %p45
      %p52 = scmp.eq.s32.totalorder %s13, 1
      %p53 = por %p51, %p52
      %p54 = scmp.ne.s32.totalorder %s46, %s49
      %p55 = scmp.eq.s32.totalorder %s13, 0
      %p56 = por %p54, %p55
      %p57 = scmp.ne.s32.totalorder %s46, %s49
      %p58 = scmp.eq.s32.totalorder %s18, 1
      %p59 = por %p57, %p58
      %p60 = scmp.ne.s32.totalorder %s49, %s50
      %p61 = scmp.eq.s32.totalorder %s18, 0
      %p62 = por %p60, %p61
      %p63 = scmp.ne.s32.totalorder %s49, %s50
      %p64 = scmp.eq.s32.totalorder %s19, 1
      %p65 = por %p63, %p64
      %p67 = scmp.ne.s32.totalorder %s50, %s66
      %p68 = scmp.eq.s32.totalorder %s19, 0
      %p69 = por %p67, %p68
      %s70 = ssub.s32 %s20, %s39
      %s71 = ssub.s32 %s21, %s35
      %s72 = sor.u32 %s70, %s71
      %p73 = scmp.eq.s32.totalorder %s72, 0
      %s75 = sadd.s32 %s74, 1
      %s76 = scalar_select %p73, %s74, %s75
      %p79 = pneg %p73
      %p80 = scmp.eq.s32.totalorder %s13, 1
      %p81 = por %p79, %p80
      %p82 = scmp.ne.s32.totalorder %s74, %s77
      %p83 = scmp.eq.s32.totalorder %s13, 0
      %p84 = por %p82, %p83
      %p85 = scmp.ne.s32.totalorder %s74, %s77
      %p86 = scmp.eq.s32.totalorder %s18, 1
      %p87 = por %p85, %p86
      %p88 = scmp.ne.s32.totalorder %s77, %s78
      %p89 = scmp.eq.s32.totalorder %s18, 0
      %p90 = por %p88, %p89
      %p91 = scmp.ne.s32.totalorder %s77, %s78
      %p92 = scmp.eq.s32.totalorder %s19, 1
      %p93 = por %p91, %p92
      %p95 = scmp.ne.s32.totalorder %s78, %s94
      %p96 = scmp.eq.s32.totalorder %s19, 0
      %p97 = por %p95, %p96
      %p98 = scmp.le.s32.totalorder 1, %s13
      %p99 = scmp.lt.s32.totalorder %s13, 3
      %p100 = pnand %p98, %p99
      %p101 = pneg %p100
      // Predicated region
      $region9: #{tpu_custom_call.1} parent=5 // pred_check
        _
      $region10: #{tpu_custom_call.1} parent=5 // pred_check_branch
        %103 = sbr.rel (%p100) target = $region12
      $region11: #{tpu_custom_call.1} parent=5 // pred_region
        %s104 = ssub.s32 %s13, 1
      $region12: #{tpu_custom_call.1} parent=5 // pred_fallthru
        _
      %p105 = scmp.lt.s32.totalorder %s13, 2
      // Predicated region
      $region13: #{tpu_custom_call.1} parent=5 // pred_check
        %p106 = pneg %p105
      $region14: #{tpu_custom_call.1} parent=5 // pred_check_branch
        %108 = sbr.rel (%p106) target = $region16
      $region15: #{tpu_custom_call.1} parent=5 // pred_region
        // Predicated region
        $region17: #{tpu_custom_call.1} parent=15 // pred_check
          %p109 = pneg %p56
        $region18: #{tpu_custom_call.1} parent=15 // pred_check_branch
          %111 = sbr.rel (%p109) target = $region20
        $region19: #{tpu_custom_call.1} parent=15 // pred_region
          %s112 = sand.u32 %s46, 1
          %s113 = scalar_lea.sflag [#allocation3], %s112
          %s114 = sand.u32 %s46, 1
          %s115 = smul.addr %s114, 8
          %s116 = scalar_lea.vmem [#allocation2], %s115
          %s117 = smul.u32 4, %s22
          %s119 = ssub.s32 128, 128
          %120 = vsyncadd %s113, %s119
          %s121 = sadd.s32 %s21, %s117
          %s122 = smul.addr %s20, 4
          %s123 = sadd.s32 %s121, %s122
          %s124 = smul.addr %s123, 32
          %s125 = scalar_lea.hbm %s0, %s124
          %s126 = sshll.u32 %s116, 4
          %s127 = int_to_ptr.vmem [resolvable:$true] %s126
          %132 = dma.hbm_to_vmem [thread:$0]  %s125, 128, %s127, %s113, 32, 32, 2
        $region20: #{tpu_custom_call.1} parent=15 // pred_fallthru
          _
      $region16: #{tpu_custom_call.1} parent=5 // pred_fallthru
        _
      %p133 = scmp.le.s32.totalorder 1, %s13
      %p134 = scmp.lt.s32.totalorder %s13, 3
      %p135 = pnand %p133, %p134
      %p136 = pneg %p135
      // Predicated region
      $region21: #{tpu_custom_call.1} parent=5 // pred_check
        _
      $region22: #{tpu_custom_call.1} parent=5 // pred_check_branch
        %138 = sbr.rel (%p135) target = $region24
      $region23: #{tpu_custom_call.1} parent=5 // pred_region
        %s139 = ssub.s32 %s13, 1
        %s140 = sand.u32 %s49, 1
        %s141 = scalar_lea.sflag [#allocation3], %s140
        %s142 = sand.u32 %s49, 1
        %s143 = smul.addr %s142, 8
        %s144 = scalar_lea.vmem [#allocation2], %s143
        // Predicated region
        $region25: #{tpu_custom_call.1} parent=23 // pred_check
          %p145 = pneg %p62
        $region26: #{tpu_custom_call.1} parent=23 // pred_check_branch
          %147 = sbr.rel (%p145) target = $region28
        $region27: #{tpu_custom_call.1} parent=23 // pred_region
          %148 = dma.done %s141, 128
        $region28: #{tpu_custom_call.1} parent=23 // pred_fallthru
          _
        %s149 = sand.u32 %s49, 1
        %s150 = scalar_lea.sflag [#allocation3], %s149
        %s151 = sand.u32 %s49, 1
        %s152 = smul.addr %s151, 8
        %s153 = scalar_lea.vmem [#allocation2], %s152
        %p154 = pneg %p62
        %p155 = pneg %p59
        %p156 = pneg %p90
        %p157 = pneg %p87
        %s158 = sand.u32 %s77, 1
        %s159 = scalar_lea.sflag [#allocation4], %s158
        %s160 = sand.u32 %s77, 1
        %s161 = smul.addr %s160, 2
        %s162 = scalar_lea.vmem [#allocation5], %s161
        %s163 = smul.u32 4, %s25
        %v164 = vld [vmem:[%s144] sm:$0x3]
        %v165 = vld [vmem:[%s144 + $0x2] sm:$0x3]
        %v166 = vld [vmem:[%s144 + $0x4] sm:$0x3]
        %v167 = vld [vmem:[%s144 + $0x6] sm:$0x3]
        %vm168 = vcmask 1041408
        %v169 = vsel %vm168, %v164, -inf
        %v170 = vsel %vm168, %v165, -inf
        %v171 = vsel %vm168, %v166, -inf
        %v172 = vsel %vm168, %v167, -inf
        %v173 = vmax.f32 %v169, %v170
        %v174 = vmax.f32 %v171, %v172
        %v175 = vmax.f32 %v173, %v174
        %p176 = scmp.eq.s32.totalorder %s25, 0
        // Predicated region
        $region29: #{tpu_custom_call.1} parent=23 // pred_check
          %p177 = pneg %p176
        $region30: #{tpu_custom_call.1} parent=23 // pred_check_branch
          %179 = sbr.rel (%p177) target = $region32
        $region31: #{tpu_custom_call.1} parent=23 // pred_region
          %180 = vst [vmem:[%s162] sm:$0x3] %v175
        $region32: #{tpu_custom_call.1} parent=23 // pred_fallthru
          _
        %p181 = scmp.gt.s32.totalorder %s25, 0
        // Predicated region
        $region33: #{tpu_custom_call.1} parent=23 // pred_check
          %p182 = pneg %p181
        $region34: #{tpu_custom_call.1} parent=23 // pred_check_branch
          %184 = sbr.rel (%p182) target = $region36
        $region35: #{tpu_custom_call.1} parent=23 // pred_region
          %v185 = vld [vmem:[%s162] sm:$0x3]
          %v186 = vmax.f32 %v185, %v175
          %187 = vst [vmem:[%s162] sm:$0x3] %v186
        $region36: #{tpu_custom_call.1} parent=23 // pred_fallthru
          _
        %s188 = sand.u32 %s77, 1
        %s189 = scalar_lea.sflag [#allocation4], %s188
        %s190 = sand.u32 %s77, 1
        %s191 = smul.addr %s190, 2
        %s192 = scalar_lea.vmem [#allocation5], %s191
        // Predicated region
        $region37: #{tpu_custom_call.1} parent=23 // pred_check
          %p193 = pneg %p87
        $region38: #{tpu_custom_call.1} parent=23 // pred_check_branch
          %195 = sbr.rel (%p193) target = $region40
        $region39: #{tpu_custom_call.1} parent=23 // pred_region
          %s197 = ssub.s32 32, 32
          %198 = vsyncadd %s189, %s197
          %s199 = sadd.s32 %s24, %s23
          %s200 = smul.addr %s199, 32
          %s201 = scalar_lea.hbm %s1, %s200
          %s203 = sshll.u32 %s192, 4
          %s204 = int_to_ptr.vmem [resolvable:$true] %s203
          %206 = dma.vmem_to_hbm [thread:$0]  %s204, 32, %s201, %s189
        $region40: #{tpu_custom_call.1} parent=23 // pred_fallthru
          _
      $region24: #{tpu_custom_call.1} parent=5 // pred_fallthru
        _
      %p207 = scmp.le.s32.totalorder 2, %s13
      // Predicated region
      $region41: #{tpu_custom_call.1} parent=5 // pred_check
        %p208 = pneg %p207
      $region42: #{tpu_custom_call.1} parent=5 // pred_check_branch
        %210 = sbr.rel (%p208) target = $region44
      $region43: #{tpu_custom_call.1} parent=5 // pred_region
        %s211 = ssub.s32 %s13, 2
        // Predicated region
        $region45: #{tpu_custom_call.1} parent=43 // pred_check
          %p212 = pneg %p93
        $region46: #{tpu_custom_call.1} parent=43 // pred_check_branch
          %214 = sbr.rel (%p212) target = $region48
        $region47: #{tpu_custom_call.1} parent=43 // pred_region
          %s215 = sand.u32 %s78, 1
          %s216 = scalar_lea.sflag [#allocation4], %s215
          %s217 = sand.u32 %s78, 1
          %s218 = smul.addr %s217, 2
          %s219 = scalar_lea.vmem [#allocation5], %s218
          %220 = dma.done %s216, 32
        $region48: #{tpu_custom_call.1} parent=43 // pred_fallthru
          _
      $region44: #{tpu_custom_call.1} parent=5 // pred_fallthru
        _
    $region6: #{tpu_custom_call.1} parent=1 // loop_footer
      %s17 = sadd.s32 1, %s13
    $region7: #{tpu_custom_call.1} parent=1 // loop_footer_branch
      %12 = sbr.rel target = $region3
    $region8: #{tpu_custom_call.1} parent=1 // loop_exit
      _
    %221 = vsyncpa [#allocation3], 1
    %s222 = scalar_lea.sflag [#allocation3], 1
    %223 = vsyncpa %s222, 1
    %224 = vsyncpa [#allocation4], 1
    %s225 = scalar_lea.sflag [#allocation4], 1
    %226 = vsyncpa %s225, 1

</llo_original>
